<compile_context>
chip_gen: v7x
topology: tpu7x:2x2x1
jax: 0.10.0
libtpu: 0.0.40
codegen_flags: <defaults>
</compile_context>

<pallas_src>
import jax
import jax.numpy as jnp
from jax.experimental import pallas as pl
from jax.experimental.pallas import tpu as pltpu

_LANE = 128
_SUBLANE = 8


def _round_up(x, m):
    return ((x + m - 1) // m) * m


def _mlp_head_kernel(x_ref, w1_ref, b1_ref, w2_ref, b2_ref, w3_ref, b3_ref,
                     out_ref):
    """intermediate (Linear->LeakyReLU->Linear->LeakyReLU) + classifier.

    x arrives f32 straight from HBM and is cast to bf16 here (free VPU work
    hidden under the DMA). First two matmuls run bf16 on the MXU with f32
    accumulation; bias adds / activations stay f32; the tiny final classifier
    matmul stays fully f32.
    """
    neg_slope = jnp.float32(0.01)  # torch.nn.LeakyReLU default

    x = x_ref[...].astype(jnp.bfloat16)                              # [TB, 768]

    h1 = jnp.dot(x, w1_ref[...], preferred_element_type=jnp.float32)
    h1 = h1 + b1_ref[...]                                            # [TB, Hp] f32
    h1 = jnp.maximum(h1, neg_slope * h1)                             # LeakyReLU

    h2 = jnp.dot(h1.astype(jnp.bfloat16), w2_ref[...],
                 preferred_element_type=jnp.float32)
    h2 = h2 + b2_ref[...]                                            # [TB, H2p] f32
    h2 = jnp.maximum(h2, neg_slope * h2)                             # LeakyReLU

    out = jnp.dot(h2, w3_ref[...], preferred_element_type=jnp.float32)
    out = out + b3_ref[...]                                          # [TB, n_out] f32

    out_ref[...] = out.astype(out_ref.dtype)


def seq_model_head(x_cls, params, *, batch_tile=None):
    """Run the SeqModel head on the CLS embeddings.

    x_cls:  [B, 768] float32 (stand-in for transformer(...)[0][:, 0])
    params: dict with w1[768,H], b1[1,H], w2[H,H//2], b2[1,H//2],
            w3[H//2,n_out], b3[1,n_out]   (all float32)
    returns: logits [B, n_out] float32
    """
    w1, b1 = params["w1"], params["b1"]
    w2, b2 = params["w2"], params["b2"]
    w3, b3 = params["w3"], params["b3"]

    B, D_in = x_cls.shape
    H = w1.shape[1]
    H2 = w2.shape[1]
    n_out = w3.shape[1]

    # Lane-pad hidden widths to 128 with zeros (numerically exact). Do NOT pad
    # beyond 128: the kernel is HBM-bound, MXU under-utilization is free.
    H_p = _round_up(H, _LANE)
    H2_p = _round_up(H2, _LANE)

    # Batch tile: cap 1024 rows (f32 x tile double-buffered ~6 MiB, fits every
    # generation's scoped VMEM with the explicit limit below); >=2 grid steps
    # when B allows so both v7x TensorCores get work. No batch padding — Pallas
    # masks the ragged last block.
    if batch_tile is None:
        batch_tile = min(1024, max(_SUBLANE,
                                   _round_up(pl.cdiv(B, 2), _SUBLANE)))
    batch_tile = _round_up(batch_tile, _SUBLANE)
    grid = (pl.cdiv(B, batch_tile),)

    def pad2(a, rows, cols, dtype):
        return jnp.pad(a, ((0, rows - a.shape[0]),
                           (0, cols - a.shape[1]))).astype(dtype)

    # Tiny one-time weight casts/pads (negligible bytes vs. the x stream).
    w1_p = pad2(w1, D_in, H_p, jnp.bfloat16)
    w2_p = pad2(w2, H_p, H2_p, jnp.bfloat16)
    w3_p = pad2(w3, H2_p, n_out, jnp.float32)   # classifier stays f32
    b1_p = pad2(b1, 1, H_p, jnp.float32)
    b2_p = pad2(b2, 1, H2_p, jnp.float32)
    b3_p = b3.astype(jnp.float32)

    # Weights/biases are small: replicate the full array to every grid step
    # (constant block index -> stays resident in VMEM across the grid).
    rep = lambda shape: pl.BlockSpec(shape, lambda i: (0, 0))

    flops = 2 * B * (D_in * H_p + H_p * H2_p + H2_p * n_out)
    bytes_accessed = (
        x_cls.size * x_cls.dtype.itemsize
        + (w1_p.size + w2_p.size) * 2
        + w3_p.size * 4
        + (b1_p.size + b2_p.size + b3_p.size) * 4
        + B * n_out * 4)

    return pl.pallas_call(
        _mlp_head_kernel,
        out_shape=jax.ShapeDtypeStruct((B, n_out), jnp.float32),
        grid_spec=pltpu.PrefetchScalarGridSpec(
            num_scalar_prefetch=0,
            grid=grid,
            in_specs=[
                pl.BlockSpec((batch_tile, D_in), lambda i: (i, 0)),   # x tile
                rep((D_in, H_p)), rep((1, H_p)),
                rep((H_p, H2_p)), rep((1, H2_p)),
                rep((H2_p, n_out)), rep((1, n_out)),
            ],
            out_specs=pl.BlockSpec((batch_tile, n_out), lambda i: (i, 0)),
        ),
        compiler_params=pltpu.CompilerParams(
            dimension_semantics=("parallel",),
            vmem_limit_bytes=32 * 1024 * 1024),
        cost_estimate=pl.CostEstimate(
            flops=flops, transcendentals=0, bytes_accessed=bytes_accessed),
    )(x_cls, w1_p, b1_p, w2_p, b2_p, w3_p, b3_p)


def init_params(key, interm_size=64, n_out=6):
    """Deterministic init mimicking torch.nn.Linear (uniform +/- 1/sqrt(fan_in))."""
    H = interm_size
    H2 = interm_size >> 1
    ks = jax.random.split(key, 6)

    def lin(kw, kb, fan_in, fan_out):
        bound = 1.0 / jnp.sqrt(jnp.float32(fan_in))
        w = jax.random.uniform(kw, (fan_in, fan_out), jnp.float32, -bound, bound)
        b = jax.random.uniform(kb, (1, fan_out), jnp.float32, -bound, bound)
        return w, b

    w1, b1 = lin(ks[0], ks[1], 768, H)
    w2, b2 = lin(ks[2], ks[3], H, H2)
    w3, b3 = lin(ks[4], ks[5], H2, n_out)
    return {"w1": w1, "b1": b1, "w2": w2, "b2": b2, "w3": w3, "b3": b3}


def _reference_mixed(x, p):
    """Pure-JAX reference mirroring the kernel precision (bf16 x/w1/w2, f32 w3)."""
    ns = jnp.float32(0.01)
    h1 = jnp.dot(x.astype(jnp.bfloat16), p["w1"].astype(jnp.bfloat16),
                 preferred_element_type=jnp.float32) + p["b1"]
    h1 = jnp.maximum(h1, ns * h1)
    h2 = jnp.dot(h1.astype(jnp.bfloat16), p["w2"].astype(jnp.bfloat16),
                 preferred_element_type=jnp.float32) + p["b2"]
    h2 = jnp.maximum(h2, ns * h2)
    return jnp.dot(h2, p["w3"], preferred_element_type=jnp.float32,
                   precision=jax.lax.Precision.HIGHEST) + p["b3"]


def _reference_f32(x, p):
    """Full-f32 PyTorch-equivalent reference."""
    ns = jnp.float32(0.01)
    h1 = jnp.dot(x, p["w1"], precision=jax.lax.Precision.HIGHEST) + p["b1"]
    h1 = jnp.maximum(h1, ns * h1)
    h2 = jnp.dot(h1, p["w2"], precision=jax.lax.Precision.HIGHEST) + p["b2"]
    h2 = jnp.maximum(h2, ns * h2)
    return jnp.dot(h2, p["w3"], precision=jax.lax.Precision.HIGHEST) + p["b3"]


if __name__ == "__main__":
    key = jax.random.PRNGKey(0)
    k_x, k_p = jax.random.split(key)

    B = 20                # not a multiple of the tile -> exercises ragged last block
    INTERM = 64           # interm_size
    N_OUT = 6             # multitask=True -> 6 classes

    # Stand-in for transformer(...)[0][:, 0] : CLS embeddings [B, 768]
    x_cls = jax.random.normal(k_x, (B, 768), dtype=jnp.float32)
    params = init_params(k_p, interm_size=INTERM, n_out=N_OUT)

    logits = seq_model_head(x_cls, params)
    logits = jax.block_until_ready(logits)

    assert logits.shape == (B, N_OUT)

    # Tight check vs reference with the kernel's exact mixed precision.
    ref_mixed = _reference_mixed(x_cls, params)
    assert jnp.allclose(logits, ref_mixed, atol=5e-3, rtol=5e-3)

    # Sanity check vs full-f32 PyTorch-equivalent reference (bf16 drift only).
    ref_f32 = _reference_f32(x_cls, params)
    assert jnp.allclose(logits, ref_f32, atol=5e-2, rtol=5e-2)

    print("KERNEL_OK")
</pallas_src>

<mosaic_0001>
module attributes {stable_mosaic.version = 11 : i64} {
  func.func @_mlp_head_kernel(%arg0: i32, %arg1: memref<16x768xf32, #tpu.memory_space<vmem>>, %arg2: memref<768x128xbf16, #tpu.memory_space<vmem>>, %arg3: memref<1x128xf32, #tpu.memory_space<vmem>>, %arg4: memref<128x128xbf16, #tpu.memory_space<vmem>>, %arg5: memref<1x128xf32, #tpu.memory_space<vmem>>, %arg6: memref<128x6xf32, #tpu.memory_space<vmem>>, %arg7: memref<1x6xf32, #tpu.memory_space<vmem>>, %arg8: memref<16x6xf32, #tpu.memory_space<vmem>>) attributes {dimension_semantics = [#tpu.dimension_semantics<parallel>], iteration_bounds = array<i64: 2>, scalar_prefetch = 0 : i64, scratch_operands = 0 : i64, tpu.core_type = #tpu.core_type<tc>, window_params = [{transform_indices = @transform_0, window_bounds = array<i64: 16, 768>}, {pipeline_mode = #tpu.pipeline_mode<synchronous>, transform_indices = @transform_1, window_bounds = array<i64: 768, 128>}, {pipeline_mode = #tpu.pipeline_mode<synchronous>, transform_indices = @transform_2, window_bounds = array<i64: 1, 128>}, {pipeline_mode = #tpu.pipeline_mode<synchronous>, transform_indices = @transform_3, window_bounds = array<i64: 128, 128>}, {pipeline_mode = #tpu.pipeline_mode<synchronous>, transform_indices = @transform_4, window_bounds = array<i64: 1, 128>}, {pipeline_mode = #tpu.pipeline_mode<synchronous>, transform_indices = @transform_5, window_bounds = array<i64: 128, 6>}, {pipeline_mode = #tpu.pipeline_mode<synchronous>, transform_indices = @transform_6, window_bounds = array<i64: 1, 6>}, {transform_indices = @transform_7, window_bounds = array<i64: 16, 6>}]} {
    %c0 = arith.constant 0 : index
    %c0_0 = arith.constant 0 : index
    %0 = vector.load %arg1[%c0, %c0_0] : memref<16x768xf32, #tpu.memory_space<vmem>>, vector<16x768xf32>
    %1 = arith.truncf %0 : vector<16x768xf32> to vector<16x768xbf16>
    %c0_1 = arith.constant 0 : index
    %c0_2 = arith.constant 0 : index
    %2 = vector.load %arg2[%c0_1, %c0_2] : memref<768x128xbf16, #tpu.memory_space<vmem>>, vector<768x128xbf16>
    %cst = arith.constant dense<0.000000e+00> : vector<16x128xf32>
    %3 = tpu.matmul %1, %2, %cst {dimension_numbers = #tpu.dot_dimension_numbers<[1], [0], [0], [1], [0, 0, 1, 1], [], []>} : vector<16x768xbf16>, vector<768x128xbf16>, vector<16x128xf32> -> vector<16x128xf32>
    %c0_3 = arith.constant 0 : index
    %c0_4 = arith.constant 0 : index
    %4 = vector.load %arg3[%c0_3, %c0_4] : memref<1x128xf32, #tpu.memory_space<vmem>>, vector<1x128xf32>
    %5 = vector.broadcast %4 : vector<1x128xf32> to vector<16x128xf32>
    %6 = arith.addf %3, %5 : vector<16x128xf32>
    %cst_5 = arith.constant 0.00999999977 : f32
    %7 = vector.broadcast %cst_5 : f32 to vector<16x128xf32>
    %8 = arith.mulf %7, %6 : vector<16x128xf32>
    %9 = arith.maximumf %6, %8 : vector<16x128xf32>
    %10 = arith.truncf %9 : vector<16x128xf32> to vector<16x128xbf16>
    %c0_6 = arith.constant 0 : index
    %c0_7 = arith.constant 0 : index
    %11 = vector.load %arg4[%c0_6, %c0_7] : memref<128x128xbf16, #tpu.memory_space<vmem>>, vector<128x128xbf16>
    %cst_8 = arith.constant dense<0.000000e+00> : vector<16x128xf32>
    %12 = tpu.matmul %10, %11, %cst_8 {dimension_numbers = #tpu.dot_dimension_numbers<[1], [0], [0], [1], [0, 0, 1, 1], [], []>} : vector<16x128xbf16>, vector<128x128xbf16>, vector<16x128xf32> -> vector<16x128xf32>
    %c0_9 = arith.constant 0 : index
    %c0_10 = arith.constant 0 : index
    %13 = vector.load %arg5[%c0_9, %c0_10] : memref<1x128xf32, #tpu.memory_space<vmem>>, vector<1x128xf32>
    %14 = vector.broadcast %13 : vector<1x128xf32> to vector<16x128xf32>
    %15 = arith.addf %12, %14 : vector<16x128xf32>
    %cst_11 = arith.constant 0.00999999977 : f32
    %16 = vector.broadcast %cst_11 : f32 to vector<16x128xf32>
    %17 = arith.mulf %16, %15 : vector<16x128xf32>
    %18 = arith.maximumf %15, %17 : vector<16x128xf32>
    %c0_12 = arith.constant 0 : index
    %c0_13 = arith.constant 0 : index
    %19 = vector.load %arg6[%c0_12, %c0_13] : memref<128x6xf32, #tpu.memory_space<vmem>>, vector<128x6xf32>
    %cst_14 = arith.constant dense<0.000000e+00> : vector<16x6xf32>
    %20 = tpu.matmul %18, %19, %cst_14 {dimension_numbers = #tpu.dot_dimension_numbers<[1], [0], [0], [1], [0, 0, 1, 1], [], []>} : vector<16x128xf32>, vector<128x6xf32>, vector<16x6xf32> -> vector<16x6xf32>
    %c0_15 = arith.constant 0 : index
    %c0_16 = arith.constant 0 : index
    %21 = vector.load %arg7[%c0_15, %c0_16] : memref<1x6xf32, #tpu.memory_space<vmem>>, vector<1x6xf32>
    %22 = vector.broadcast %21 : vector<1x6xf32> to vector<16x6xf32>
    %23 = arith.addf %20, %22 : vector<16x6xf32>
    %c0_17 = arith.constant 0 : index
    %c0_18 = arith.constant 0 : index
    %24 = vector.load %arg8[%c0_17, %c0_18] : memref<16x6xf32, #tpu.memory_space<vmem>>, vector<16x6xf32>
    tpu.vector_store %arg8[%c0_17, %c0_18], %23 {strides = array<i32>} : memref<16x6xf32, #tpu.memory_space<vmem>>, vector<16x6xf32>,
    return
  }
  func.func @transform_0(%arg0: i32) -> (i32, i32) {
    %c0_i32 = arith.constant 0 : i32
    %c0_i32_0 = arith.constant 0 : i32
    return %arg0, %c0_i32 : i32, i32
  }
  func.func @transform_1(%arg0: i32) -> (i32, i32) {
    %c0_i32 = arith.constant 0 : i32
    %c0_i32_0 = arith.constant 0 : i32
    %c0_i32_1 = arith.constant 0 : i32
    return %c0_i32, %c0_i32_0 : i32, i32
  }
  func.func @transform_2(%arg0: i32) -> (i32, i32) {
    %c0_i32 = arith.constant 0 : i32
    %c0_i32_0 = arith.constant 0 : i32
    %c0_i32_1 = arith.constant 0 : i32
    return %c0_i32, %c0_i32_0 : i32, i32
  }
  func.func @transform_3(%arg0: i32) -> (i32, i32) {
    %c0_i32 = arith.constant 0 : i32
    %c0_i32_0 = arith.constant 0 : i32
    %c0_i32_1 = arith.constant 0 : i32
    return %c0_i32, %c0_i32_0 : i32, i32
  }
  func.func @transform_4(%arg0: i32) -> (i32, i32) {
    %c0_i32 = arith.constant 0 : i32
    %c0_i32_0 = arith.constant 0 : i32
    %c0_i32_1 = arith.constant 0 : i32
    return %c0_i32, %c0_i32_0 : i32, i32
  }
  func.func @transform_5(%arg0: i32) -> (i32, i32) {
    %c0_i32 = arith.constant 0 : i32
    %c0_i32_0 = arith.constant 0 : i32
    %c0_i32_1 = arith.constant 0 : i32
    return %c0_i32, %c0_i32_0 : i32, i32
  }
  func.func @transform_6(%arg0: i32) -> (i32, i32) {
    %c0_i32 = arith.constant 0 : i32
    %c0_i32_0 = arith.constant 0 : i32
    %c0_i32_1 = arith.constant 0 : i32
    return %c0_i32, %c0_i32_0 : i32, i32
  }
  func.func @transform_7(%arg0: i32) -> (i32, i32) {
    %c0_i32 = arith.constant 0 : i32
    %c0_i32_0 = arith.constant 0 : i32
    return %arg0, %c0_i32 : i32, i32
  }
}

</mosaic_0001>

<llo_original>
// kernel: tpu_custom_call.1
$region0: #{tpu_custom_call.1}
  #allocation0 [shape = 'u32[]', space=smem, size = 0x4, offset = 0x4, fixed_abs, tag = 'smem constant byte address 0x4 - core index']
  #allocation1 [shape = 'u32[144,128]{1,0:T(1,128)}', space=vmem, size = 0x12000, scoped, tag = 'internal scratch']
  %s0 = inlined_call_operand.hbm [shape: f32[20,768], index: 0, kind: input, shape index: {}]
  %s1 = inlined_call_operand.hbm [shape: bf16[768,128], index: 1, kind: input, shape index: {}]
  %s2 = inlined_call_operand.vmem [shape: f32[1,128], index: 2, kind: input, shape index: {}]
  %s3 = inlined_call_operand.vmem [shape: bf16[128,128], index: 3, kind: input, shape index: {}]
  %s4 = inlined_call_operand.vmem [shape: f32[1,128], index: 4, kind: input, shape index: {}]
  %s5 = inlined_call_operand.vmem [shape: f32[128,6], index: 5, kind: input, shape index: {}]
  %s6 = inlined_call_operand.vmem [shape: f32[1,6], index: 6, kind: input, shape index: {}]
  %s7 = inlined_call_operand.vmem [shape: f32[20,6], index: 7, kind: output, shape index: {}]
  %s8 = sld [smem:[#allocation0]]
  $region117: #{tpu_custom_call.1} parent=0
    _
  %s10 = ssub.s32 1, %s8
  %s11 = scalar_select 0, %s10, %s8
  $region1: #{tpu_custom_call.1} parent=0
    #allocation2 [shape = 'u8[98304]{0}', space=vmem, size = 0x18000, scoped, tag = 'input window, operand 0']
    #allocation3 [shape = 's32[2]{0}', space=sflag, size = 0x8, scoped, tag = 'scoped memory for tpu_custom_call.1']
    #allocation4 [shape = 'u8[196608]{0}', space=vmem, size = 0x30000, scoped, tag = 'input window, operand 1, single buffered']
    #allocation5 [shape = 's32[1]{0}', space=sflag, size = 0x4, scoped, tag = 'scoped memory for tpu_custom_call.1']
    #allocation6 [shape = 'u8[16384]{0}', space=vmem, size = 0x4000, scoped, tag = 'output window, operand 0']
    %12 = vsyncpa [#allocation3], 0
    %s13 = scalar_lea.sflag [#allocation3], 1
    %14 = vsyncpa %s13, 0
    %15 = vsyncpa [#allocation5], 0
    loop: start=0, step=1, limit=4
    $region2: #{tpu_custom_call.1} parent=1 // loop_pre_header
      _
    $region3: #{tpu_custom_call.1} parent=1 // loop_header
      %s17 = sphi 0, %s21
      %p18 = scmp.ge.s32.totalorder %s17, 4
      %s27 = sphi 0, %s29
      %s30 = sphi 0, %s27
      %s31 = sphi 0, %s30
      %s47 = sphi 0, %s31
      %s51 = sphi 0, %s51
      %s53 = sphi 0, %s51
      %s54 = sphi 0, %s53
      %s68 = sphi 0, %s54
      %s72 = sphi 0, %s72
      %s74 = sphi 0, %s72
      %s75 = sphi 0, %s74
      %s89 = sphi 0, %s75
      %s93 = sphi 0, %s93
      %s95 = sphi 0, %s93
      %s96 = sphi 0, %s95
      %s110 = sphi 0, %s96
      %s114 = sphi 0, %s114
      %s116 = sphi 0, %s114
      %s117 = sphi 0, %s116
      %s131 = sphi 0, %s117
      %s135 = sphi 0, %s135
      %s137 = sphi 0, %s135
      %s138 = sphi 0, %s137
      %s152 = sphi 0, %s138
      %s156 = sphi 0, %s156
      %s158 = sphi 0, %s156
      %s159 = sphi 0, %s158
      %s173 = sphi 0, %s159
      %s179 = sphi 0, %s181
      %s182 = sphi 0, %s179
      %s183 = sphi 0, %s182
      %s199 = sphi 0, %s183
    $region4: #{tpu_custom_call.1} parent=1 // loop_header_branch
      %20 = sbr.rel (%p18) target = $region8
    $region5: #{tpu_custom_call.1} parent=1 // loop_body
      %s22 = ssub.s32 %s17, 1
      %s23 = ssub.s32 %s17, 2
      %s24 = sadd.s32 %s17, 1
      %s25 = ssub.s32 %s17, %s24
      %p26 = scmp.eq.s32.totalorder %s25, 0
      %s28 = sadd.s32 %s27, 1
      %s29 = scalar_select %p26, %s27, %s28
      %p32 = pneg %p26
      %p33 = scmp.eq.s32.totalorder %s17, 1
      %p34 = por %p32, %p33
      %p35 = scmp.ne.s32.totalorder %s27, %s30
      %p36 = scmp.eq.s32.totalorder %s17, 0
      %p37 = por %p35, %p36
      %p38 = scmp.ne.s32.totalorder %s27, %s30
      %p39 = scmp.eq.s32.totalorder %s22, 1
      %p40 = por %p38, %p39
      %p41 = scmp.ne.s32.totalorder %s30, %s31
      %p42 = scmp.eq.s32.totalorder %s22, 0
      %p43 = por %p41, %p42
      %p44 = scmp.ne.s32.totalorder %s30, %s31
      %p45 = scmp.eq.s32.totalorder %s23, 1
      %p46 = por %p44, %p45
      %p48 = scmp.ne.s32.totalorder %s31, %s47
      %p49 = scmp.eq.s32.totalorder %s23, 0
      %p50 = por %p48, %p49
      %s52 = sadd.s32 %s51, 1
      %p55 = scmp.eq.s32.totalorder %s17, 1
      %p56 = scmp.ne.s32.totalorder %s51, %s53
      %p57 = scmp.eq.s32.totalorder %s17, 0
      %p58 = por %p56, %p57
      %p59 = scmp.ne.s32.totalorder %s51, %s53
      %p60 = scmp.eq.s32.totalorder %s22, 1
      %p61 = por %p59, %p60
      %p62 = scmp.ne.s32.totalorder %s53, %s54
      %p63 = scmp.eq.s32.totalorder %s22, 0
      %p64 = por %p62, %p63
      %p65 = scmp.ne.s32.totalorder %s53, %s54
      %p66 = scmp.eq.s32.totalorder %s23, 1
      %p67 = por %p65, %p66
      %p69 = scmp.ne.s32.totalorder %s54, %s68
      %p70 = scmp.eq.s32.totalorder %s23, 0
      %p71 = por %p69, %p70
      %s73 = sadd.s32 %s72, 1
      %p76 = scmp.eq.s32.totalorder %s17, 1
      %p77 = scmp.ne.s32.totalorder %s72, %s74
      %p78 = scmp.eq.s32.totalorder %s17, 0
      %p79 = por %p77, %p78
      %p80 = scmp.ne.s32.totalorder %s72, %s74
      %p81 = scmp.eq.s32.totalorder %s22, 1
      %p82 = por %p80, %p81
      %p83 = scmp.ne.s32.totalorder %s74, %s75
      %p84 = scmp.eq.s32.totalorder %s22, 0
      %p85 = por %p83, %p84
      %p86 = scmp.ne.s32.totalorder %s74, %s75
      %p87 = scmp.eq.s32.totalorder %s23, 1
      %p88 = por %p86, %p87
      %p90 = scmp.ne.s32.totalorder %s75, %s89
      %p91 = scmp.eq.s32.totalorder %s23, 0
      %p92 = por %p90, %p91
      %s94 = sadd.s32 %s93, 1
      %p97 = scmp.eq.s32.totalorder %s17, 1
      %p98 = scmp.ne.s32.totalorder %s93, %s95
      %p99 = scmp.eq.s32.totalorder %s17, 0
      %p100 = por %p98, %p99
      %p101 = scmp.ne.s32.totalorder %s93, %s95
      %p102 = scmp.eq.s32.totalorder %s22, 1
      %p103 = por %p101, %p102
      %p104 = scmp.ne.s32.totalorder %s95, %s96
      %p105 = scmp.eq.s32.totalorder %s22, 0
      %p106 = por %p104, %p105
      %p107 = scmp.ne.s32.totalorder %s95, %s96
      %p108 = scmp.eq.s32.totalorder %s23, 1
      %p109 = por %p107, %p108
      %p111 = scmp.ne.s32.totalorder %s96, %s110
      %p112 = scmp.eq.s32.totalorder %s23, 0
      %p113 = por %p111, %p112
      %s115 = sadd.s32 %s114, 1
      %p118 = scmp.eq.s32.totalorder %s17, 1
      %p119 = scmp.ne.s32.totalorder %s114, %s116
      %p120 = scmp.eq.s32.totalorder %s17, 0
      %p121 = por %p119, %p120
      %p122 = scmp.ne.s32.totalorder %s114, %s116
      %p123 = scmp.eq.s32.totalorder %s22, 1
      %p124 = por %p122, %p123
      %p125 = scmp.ne.s32.totalorder %s116, %s117
      %p126 = scmp.eq.s32.totalorder %s22, 0
      %p127 = por %p125, %p126
      %p128 = scmp.ne.s32.totalorder %s116, %s117
      %p129 = scmp.eq.s32.totalorder %s23, 1
      %p130 = por %p128, %p129
      %p132 = scmp.ne.s32.totalorder %s117, %s131
      %p133 = scmp.eq.s32.totalorder %s23, 0
      %p134 = por %p132, %p133
      %s136 = sadd.s32 %s135, 1
      %p139 = scmp.eq.s32.totalorder %s17, 1
      %p140 = scmp.ne.s32.totalorder %s135, %s137
      %p141 = scmp.eq.s32.totalorder %s17, 0
      %p142 = por %p140, %p141
      %p143 = scmp.ne.s32.totalorder %s135, %s137
      %p144 = scmp.eq.s32.totalorder %s22, 1
      %p145 = por %p143, %p144
      %p146 = scmp.ne.s32.totalorder %s137, %s138
      %p147 = scmp.eq.s32.totalorder %s22, 0
      %p148 = por %p146, %p147
      %p149 = scmp.ne.s32.totalorder %s137, %s138
      %p150 = scmp.eq.s32.totalorder %s23, 1
      %p151 = por %p149, %p150
      %p153 = scmp.ne.s32.totalorder %s138, %s152
      %p154 = scmp.eq.s32.totalorder %s23, 0
      %p155 = por %p153, %p154
      %s157 = sadd.s32 %s156, 1
      %p160 = scmp.eq.s32.totalorder %s17, 1
      %p161 = scmp.ne.s32.totalorder %s156, %s158
      %p162 = scmp.eq.s32.totalorder %s17, 0
      %p163 = por %p161, %p162
      %p164 = scmp.ne.s32.totalorder %s156, %s158
      %p165 = scmp.eq.s32.totalorder %s22, 1
      %p166 = por %p164, %p165
      %p167 = scmp.ne.s32.totalorder %s158, %s159
      %p168 = scmp.eq.s32.totalorder %s22, 0
      %p169 = por %p167, %p168
      %p170 = scmp.ne.s32.totalorder %s158, %s159
      %p171 = scmp.eq.s32.totalorder %s23, 1
      %p172 = por %p170, %p171
      %p174 = scmp.ne.s32.totalorder %s159, %s173
      %p175 = scmp.eq.s32.totalorder %s23, 0
      %p176 = por %p174, %p175
      %s177 = ssub.s32 %s17, %s24
      %p178 = scmp.eq.s32.totalorder %s177, 0
      %s180 = sadd.s32 %s179, 1
      %s181 = scalar_select %p178, %s179, %s180
      %p184 = pneg %p178
      %p185 = scmp.eq.s32.totalorder %s17, 1
      %p186 = por %p184, %p185
      %p187 = scmp.ne.s32.totalorder %s179, %s182
      %p188 = scmp.eq.s32.totalorder %s17, 0
      %p189 = por %p187, %p188
      %p190 = scmp.ne.s32.totalorder %s179, %s182
      %p191 = scmp.eq.s32.totalorder %s22, 1
      %p192 = por %p190, %p191
      %p193 = scmp.ne.s32.totalorder %s182, %s183
      %p194 = scmp.eq.s32.totalorder %s22, 0
      %p195 = por %p193, %p194
      %p196 = scmp.ne.s32.totalorder %s182, %s183
      %p197 = scmp.eq.s32.totalorder %s23, 1
      %p198 = por %p196, %p197
      %p200 = scmp.ne.s32.totalorder %s183, %s199
      %p201 = scmp.eq.s32.totalorder %s23, 0
      %p202 = por %p200, %p201
      %p203 = scmp.le.s32.totalorder 1, %s17
      %p204 = scmp.lt.s32.totalorder %s17, 3
      %p205 = pnand %p203, %p204
      %p206 = pneg %p205
      // Predicated region
      $region9: #{tpu_custom_call.1} parent=5 // pred_check
        _
      $region10: #{tpu_custom_call.1} parent=5 // pred_check_branch
        %208 = sbr.rel (%p205) target = $region12
      $region11: #{tpu_custom_call.1} parent=5 // pred_region
        %s209 = ssub.s32 %s17, 1
        // Predicated region
        $region13: #{tpu_custom_call.1} parent=11 // pred_check
          %p210 = pneg %p64
        $region14: #{tpu_custom_call.1} parent=11 // pred_check_branch
          %212 = sbr.rel (%p210) target = $region16
        $region15: #{tpu_custom_call.1} parent=11 // pred_region
          %s214 = ssub.s32 6144, 6144
          %215 = vsyncadd [#allocation5], %s214
          %s216 = sshll.u32 [#allocation4], 4
          %s217 = int_to_ptr.vmem [resolvable:$true] %s216
          %222 = dma.hbm_to_vmem [thread:$0]  %s1, 6144, %s217, [#allocation5], 64, 64, 4
        $region16: #{tpu_custom_call.1} parent=11 // pred_fallthru
          _
        // Predicated region
        $region17: #{tpu_custom_call.1} parent=11 // pred_check
          %p223 = pneg %p85
        $region18: #{tpu_custom_call.1} parent=11 // pred_check_branch
          %225 = sbr.rel (%p223) target = $region20
        $region19: #{tpu_custom_call.1} parent=11 // pred_region
          _
        $region20: #{tpu_custom_call.1} parent=11 // pred_fallthru
          _
        // Predicated region
        $region21: #{tpu_custom_call.1} parent=11 // pred_check
          %p226 = pneg %p106
        $region22: #{tpu_custom_call.1} parent=11 // pred_check_branch
          %228 = sbr.rel (%p226) target = $region24
        $region23: #{tpu_custom_call.1} parent=11 // pred_region
          _
        $region24: #{tpu_custom_call.1} parent=11 // pred_fallthru
          _
        // Predicated region
        $region25: #{tpu_custom_call.1} parent=11 // pred_check
          %p229 = pneg %p127
        $region26: #{tpu_custom_call.1} parent=11 // pred_check_branch
          %231 = sbr.rel (%p229) target = $region28
        $region27: #{tpu_custom_call.1} parent=11 // pred_region
          _
        $region28: #{tpu_custom_call.1} parent=11 // pred_fallthru
          _
        // Predicated region
        $region29: #{tpu_custom_call.1} parent=11 // pred_check
          %p232 = pneg %p148
        $region30: #{tpu_custom_call.1} parent=11 // pred_check_branch
          %234 = sbr.rel (%p232) target = $region32
        $region31: #{tpu_custom_call.1} parent=11 // pred_region
          _
        $region32: #{tpu_custom_call.1} parent=11 // pred_fallthru
          _
        // Predicated region
        $region33: #{tpu_custom_call.1} parent=11 // pred_check
          %p235 = pneg %p169
        $region34: #{tpu_custom_call.1} parent=11 // pred_check_branch
          %237 = sbr.rel (%p235) target = $region36
        $region35: #{tpu_custom_call.1} parent=11 // pred_region
          _
        $region36: #{tpu_custom_call.1} parent=11 // pred_fallthru
          _
      $region12: #{tpu_custom_call.1} parent=5 // pred_fallthru
        _
      %p238 = scmp.lt.s32.totalorder %s17, 2
      // Predicated region
      $region37: #{tpu_custom_call.1} parent=5 // pred_check
        %p239 = pneg %p238
      $region38: #{tpu_custom_call.1} parent=5 // pred_check_branch
        %241 = sbr.rel (%p239) target = $region40
      $region39: #{tpu_custom_call.1} parent=5 // pred_region
        // Predicated region
        $region41: #{tpu_custom_call.1} parent=39 // pred_check
          %p242 = pneg %p37
        $region42: #{tpu_custom_call.1} parent=39 // pred_check_branch
          %244 = sbr.rel (%p242) target = $region44
        $region43: #{tpu_custom_call.1} parent=39 // pred_region
          %s245 = sand.u32 %s27, 1
          %s246 = scalar_lea.sflag [#allocation3], %s245
          %s247 = sand.u32 %s27, 1
          %s248 = smul.addr %s247, 96
          %s249 = scalar_lea.vmem [#allocation2], %s248
          %s250 = smul.u32 2, %s17
          %s251 = ssub.s32 3, %s250
          %p252 = scmp.lt.s32.totalorder %s251, 2
          %s253 = scalar_select %p252, %s251, 2
          %s254 = smul.u32 128, %s253
          %s255 = smul.u32 %s254, 6
          %s257 = ssub.s32 1536, %s255
          %258 = vsyncadd %s246, %s257
          %p259 = scmp.ne.s32.totalorder 0, %s255
          %s260 = smul.addr %s250, 6
          %s261 = smul.addr %s260, 128
          %s262 = scalar_lea.hbm %s0, %s261
          %s263 = smul.u32 48, %s253
          %s264 = sshll.u32 %s249, 4
          %s265 = int_to_ptr.vmem [resolvable:$true] %s264
          %s266 = sshll.u32 %s263, 4
          %270 = dma.hbm_to_vmem [thread:$0]  (%p259), %s262, %s266, %s265, %s246, 768, 768, 48
        $region44: #{tpu_custom_call.1} parent=39 // pred_fallthru
          _
      $region40: #{tpu_custom_call.1} parent=5 // pred_fallthru
        _
      %p271 = scmp.le.s32.totalorder 1, %s17
      %p272 = scmp.lt.s32.totalorder %s17, 3
      %p273 = pnand %p271, %p272
      %p274 = pneg %p273
      // Predicated region
      $region45: #{tpu_custom_call.1} parent=5 // pred_check
        _
      $region46: #{tpu_custom_call.1} parent=5 // pred_check_branch
        %276 = sbr.rel (%p273) target = $region48
      $region47: #{tpu_custom_call.1} parent=5 // pred_region
        %s277 = ssub.s32 %s17, 1
        %s278 = sand.u32 %s30, 1
        %s279 = scalar_lea.sflag [#allocation3], %s278
        %s280 = sand.u32 %s30, 1
        %s281 = smul.addr %s280, 96
        %s282 = scalar_lea.vmem [#allocation2], %s281
        // Predicated region
        $region49: #{tpu_custom_call.1} parent=47 // pred_check
          %p283 = pneg %p43
        $region50: #{tpu_custom_call.1} parent=47 // pred_check_branch
          %285 = sbr.rel (%p283) target = $region52
        $region51: #{tpu_custom_call.1} parent=47 // pred_region
          %286 = dma.done %s279, 1536
        $region52: #{tpu_custom_call.1} parent=47 // pred_fallthru
          _
        // Predicated region
        $region53: #{tpu_custom_call.1} parent=47 // pred_check
          %p287 = pneg %p64
        $region54: #{tpu_custom_call.1} parent=47 // pred_check_branch
          %289 = sbr.rel (%p287) target = $region56
        $region55: #{tpu_custom_call.1} parent=47 // pred_region
          %290 = dma.done [#allocation5], 6144
        $region56: #{tpu_custom_call.1} parent=47 // pred_fallthru
          _
        %s291 = sand.u32 %s30, 1
        %s292 = scalar_lea.sflag [#allocation3], %s291
        %s293 = sand.u32 %s30, 1
        %s294 = smul.addr %s293, 96
        %s295 = scalar_lea.vmem [#allocation2], %s294
        %p296 = pneg %p43
        %p297 = pneg %p40
        %p298 = pneg %p64
        %p299 = pneg %p61
        %p300 = pneg %p85
        %p301 = pneg %p82
        %p302 = pneg %p106
        %p303 = pneg %p103
        %p304 = pneg %p127
        %p305 = pneg %p124
        %p306 = pneg %p148
        %p307 = pneg %p145
        %p308 = pneg %p169
        %p309 = pneg %p166
        %p310 = pneg %p195
        %p311 = pneg %p192
        %s312 = sand.u32 %s182, 1
        %s313 = sand.u32 %s182, 1
        %s314 = smul.addr %s313, 16
        %s315 = scalar_lea.vmem [#allocation6], %s314
        %s316 = smul.u32 2, %s22
        %s317 = ssub.s32 3, %s316
        %p318 = scmp.lt.s32.totalorder %s317, 2
        %s319 = scalar_select %p318, %s317, 2
        %s320 = smul.u32 128, %s319
        %s321 = smul.u32 %s320, 6
        %s322 = smul.u32 2, %s22
        %s323 = ssub.s32 3, %s322
        %p324 = scmp.lt.s32.totalorder %s323, 2
        %s325 = scalar_select %p324, %s323, 2
        %s326 = smul.u32 128, %s325
        %v328 = vld [vmem:[%s282] sm:$0xff]
        %v329 = vld [vmem:[%s282 + $0x8] sm:$0xff]
        %v330 = vld [vmem:[%s282 + $0x10] sm:$0xff]
        %v331 = vld [vmem:[%s282 + $0x18] sm:$0xff]
        %v332 = vld [vmem:[%s282 + $0x20] sm:$0xff]
        %v333 = vld [vmem:[%s282 + $0x28] sm:$0xff]
        %v334 = vld [vmem:[%s282 + $0x30] sm:$0xff]
        %v335 = vld [vmem:[%s282 + $0x38] sm:$0xff]
        %v336 = vld [vmem:[%s282 + $0x40] sm:$0xff]
        %v337 = vld [vmem:[%s282 + $0x48] sm:$0xff]
        %v338 = vld [vmem:[%s282 + $0x50] sm:$0xff]
        %v339 = vld [vmem:[%s282 + $0x58] sm:$0xff]
        %v340 = vpack.c.bf16 %v334, %v328
        %v341 = vpack.c.bf16 %v335, %v329
        %v342 = vpack.c.bf16 %v336, %v330
        %v343 = vpack.c.bf16 %v337, %v331
        %v344 = vpack.c.bf16 %v338, %v332
        %v345 = vpack.c.bf16 %v339, %v333
        %v346 = vld [vmem:[#allocation4] sm:$0xf]
        %v347 = vld [vmem:[#allocation4 + $0x4] sm:$0xf]
        %v348 = vld [vmem:[#allocation4 + $0x8] sm:$0xf]
        %v349 = vld [vmem:[#allocation4 + $0xc] sm:$0xf]
        %v350 = vld [vmem:[#allocation4 + $0x10] sm:$0xf]
        %v351 = vld [vmem:[#allocation4 + $0x14] sm:$0xf]
        %v352 = vld [vmem:[#allocation4 + $0x18] sm:$0xf]
        %v353 = vld [vmem:[#allocation4 + $0x1c] sm:$0xf]
        %v354 = vld [vmem:[#allocation4 + $0x20] sm:$0xf]
        %v355 = vld [vmem:[#allocation4 + $0x24] sm:$0xf]
        %v356 = vld [vmem:[#allocation4 + $0x28] sm:$0xf]
        %v357 = vld [vmem:[#allocation4 + $0x2c] sm:$0xf]
        %v358 = vld [vmem:[#allocation4 + $0x30] sm:$0xf]
        %v359 = vld [vmem:[#allocation4 + $0x34] sm:$0xf]
        %v360 = vld [vmem:[#allocation4 + $0x38] sm:$0xf]
        %v361 = vld [vmem:[#allocation4 + $0x3c] sm:$0xf]
        %v362 = vld [vmem:[#allocation4 + $0x40] sm:$0xf]
        %v363 = vld [vmem:[#allocation4 + $0x44] sm:$0xf]
        %v364 = vld [vmem:[#allocation4 + $0x48] sm:$0xf]
        %v365 = vld [vmem:[#allocation4 + $0x4c] sm:$0xf]
        %v366 = vld [vmem:[#allocation4 + $0x50] sm:$0xf]
        %v367 = vld [vmem:[#allocation4 + $0x54] sm:$0xf]
        %v368 = vld [vmem:[#allocation4 + $0x58] sm:$0xf]
        %v369 = vld [vmem:[#allocation4 + $0x5c] sm:$0xf]
        %v370 = vld [vmem:[#allocation4 + $0x60] sm:$0xf]
        %v371 = vld [vmem:[#allocation4 + $0x64] sm:$0xf]
        %v372 = vld [vmem:[#allocation4 + $0x68] sm:$0xf]
        %v373 = vld [vmem:[#allocation4 + $0x6c] sm:$0xf]
        %v374 = vld [vmem:[#allocation4 + $0x70] sm:$0xf]
        %v375 = vld [vmem:[#allocation4 + $0x74] sm:$0xf]
        %v376 = vld [vmem:[#allocation4 + $0x78] sm:$0xf]
        %v377 = vld [vmem:[#allocation4 + $0x7c] sm:$0xf]
        %v378 = vld [vmem:[#allocation4 + $0x80] sm:$0xf]
        %v379 = vld [vmem:[#allocation4 + $0x84] sm:$0xf]
        %v380 = vld [vmem:[#allocation4 + $0x88] sm:$0xf]
        %v381 = vld [vmem:[#allocation4 + $0x8c] sm:$0xf]
        %v382 = vld [vmem:[#allocation4 + $0x90] sm:$0xf]
        %v383 = vld [vmem:[#allocation4 + $0x94] sm:$0xf]
        %v384 = vld [vmem:[#allocation4 + $0x98] sm:$0xf]
        %v385 = vld [vmem:[#allocation4 + $0x9c] sm:$0xf]
        %v386 = vld [vmem:[#allocation4 + $0xa0] sm:$0xf]
        %v387 = vld [vmem:[#allocation4 + $0xa4] sm:$0xf]
        %v388 = vld [vmem:[#allocation4 + $0xa8] sm:$0xf]
        %v389 = vld [vmem:[#allocation4 + $0xac] sm:$0xf]
        %v390 = vld [vmem:[#allocation4 + $0xb0] sm:$0xf]
        %v391 = vld [vmem:[#allocation4 + $0xb4] sm:$0xf]
        %v392 = vld [vmem:[#allocation4 + $0xb8] sm:$0xf]
        %v393 = vld [vmem:[#allocation4 + $0xbc] sm:$0xf]
        %v394 = vld [vmem:[#allocation4 + $0xc0] sm:$0xf]
        %v395 = vld [vmem:[#allocation4 + $0xc4] sm:$0xf]
        %v396 = vld [vmem:[#allocation4 + $0xc8] sm:$0xf]
        %v397 = vld [vmem:[#allocation4 + $0xcc] sm:$0xf]
        %v398 = vld [vmem:[#allocation4 + $0xd0] sm:$0xf]
        %v399 = vld [vmem:[#allocation4 + $0xd4] sm:$0xf]
        %v400 = vld [vmem:[#allocation4 + $0xd8] sm:$0xf]
        %v401 = vld [vmem:[#allocation4 + $0xdc] sm:$0xf]
        %v402 = vld [vmem:[#allocation4 + $0xe0] sm:$0xf]
        %v403 = vld [vmem:[#allocation4 + $0xe4] sm:$0xf]
        %v404 = vld [vmem:[#allocation4 + $0xe8] sm:$0xf]
        %v405 = vld [vmem:[#allocation4 + $0xec] sm:$0xf]
        %v406 = vld [vmem:[#allocation4 + $0xf0] sm:$0xf]
        %v407 = vld [vmem:[#allocation4 + $0xf4] sm:$0xf]
        %v408 = vld [vmem:[#allocation4 + $0xf8] sm:$0xf]
        %v409 = vld [vmem:[#allocation4 + $0xfc] sm:$0xf]
        %v410 = vld [vmem:[#allocation4 + $0x100] sm:$0xf]
        %v411 = vld [vmem:[#allocation4 + $0x104] sm:$0xf]
        %v412 = vld [vmem:[#allocation4 + $0x108] sm:$0xf]
        %v413 = vld [vmem:[#allocation4 + $0x10c] sm:$0xf]
        %v414 = vld [vmem:[#allocation4 + $0x110] sm:$0xf]
        %v415 = vld [vmem:[#allocation4 + $0x114] sm:$0xf]
        %v416 = vld [vmem:[#allocation4 + $0x118] sm:$0xf]
        %v417 = vld [vmem:[#allocation4 + $0x11c] sm:$0xf]
        %v418 = vld [vmem:[#allocation4 + $0x120] sm:$0xf]
        %v419 = vld [vmem:[#allocation4 + $0x124] sm:$0xf]
        %v420 = vld [vmem:[#allocation4 + $0x128] sm:$0xf]
        %v421 = vld [vmem:[#allocation4 + $0x12c] sm:$0xf]
        %v422 = vld [vmem:[#allocation4 + $0x130] sm:$0xf]
        %v423 = vld [vmem:[#allocation4 + $0x134] sm:$0xf]
        %v424 = vld [vmem:[#allocation4 + $0x138] sm:$0xf]
        %v425 = vld [vmem:[#allocation4 + $0x13c] sm:$0xf]
        %v426 = vld [vmem:[#allocation4 + $0x140] sm:$0xf]
        %v427 = vld [vmem:[#allocation4 + $0x144] sm:$0xf]
        %v428 = vld [vmem:[#allocation4 + $0x148] sm:$0xf]
        %v429 = vld [vmem:[#allocation4 + $0x14c] sm:$0xf]
        %v430 = vld [vmem:[#allocation4 + $0x150] sm:$0xf]
        %v431 = vld [vmem:[#allocation4 + $0x154] sm:$0xf]
        %v432 = vld [vmem:[#allocation4 + $0x158] sm:$0xf]
        %v433 = vld [vmem:[#allocation4 + $0x15c] sm:$0xf]
        %v434 = vld [vmem:[#allocation4 + $0x160] sm:$0xf]
        %v435 = vld [vmem:[#allocation4 + $0x164] sm:$0xf]
        %v436 = vld [vmem:[#allocation4 + $0x168] sm:$0xf]
        %v437 = vld [vmem:[#allocation4 + $0x16c] sm:$0xf]
        %v438 = vld [vmem:[#allocation4 + $0x170] sm:$0xf]
        %v439 = vld [vmem:[#allocation4 + $0x174] sm:$0xf]
        %v440 = vld [vmem:[#allocation4 + $0x178] sm:$0xf]
        %v441 = vld [vmem:[#allocation4 + $0x17c] sm:$0xf]
        %v442 = vld [vmem:[%s2] sm:$0x1]
        %v444 = vlaneseq
        %v445 = vshrl.u32 %v444, 7
        %v446 = vsub.s32 0, %v445
        %v447 = vrot.slane %v442, %v446
        %v545 = vunpack.c.l.b16 %v346
        %v546 = vunpack.c.l.b16 %v347
        %v547 = vunpack.c.l.b16 %v348
        %v548 = vunpack.c.l.b16 %v349
        %v549 = vunpack.c.l.b16 %v350
        %v550 = vunpack.c.l.b16 %v351
        %v551 = vunpack.c.l.b16 %v352
        %v552 = vunpack.c.l.b16 %v353
        %v553 = vunpack.c.l.b16 %v354
        %v554 = vunpack.c.l.b16 %v355
        %v555 = vunpack.c.l.b16 %v356
        %v556 = vunpack.c.l.b16 %v357
        %v557 = vunpack.c.l.b16 %v358
        %v558 = vunpack.c.l.b16 %v359
        %v559 = vunpack.c.l.b16 %v360
        %v560 = vunpack.c.l.b16 %v361
        %v561 = vunpack.c.l.b16 %v362
        %v562 = vunpack.c.l.b16 %v363
        %v563 = vunpack.c.l.b16 %v364
        %v564 = vunpack.c.l.b16 %v365
        %v565 = vunpack.c.l.b16 %v366
        %v566 = vunpack.c.l.b16 %v367
        %v567 = vunpack.c.l.b16 %v368
        %v568 = vunpack.c.l.b16 %v369
        %v569 = vunpack.c.l.b16 %v370
        %v570 = vunpack.c.l.b16 %v371
        %v571 = vunpack.c.l.b16 %v372
        %v572 = vunpack.c.l.b16 %v373
        %v573 = vunpack.c.l.b16 %v374
        %v574 = vunpack.c.l.b16 %v375
        %v575 = vunpack.c.l.b16 %v376
        %v576 = vunpack.c.l.b16 %v377
        %v577 = vunpack.c.l.b16 %v378
        %v578 = vunpack.c.l.b16 %v379
        %v579 = vunpack.c.l.b16 %v380
        %v580 = vunpack.c.l.b16 %v381
        %v581 = vunpack.c.l.b16 %v382
        %v582 = vunpack.c.l.b16 %v383
        %v583 = vunpack.c.l.b16 %v384
        %v584 = vunpack.c.l.b16 %v385
        %v585 = vunpack.c.l.b16 %v386
        %v586 = vunpack.c.l.b16 %v387
        %v587 = vunpack.c.l.b16 %v388
        %v588 = vunpack.c.l.b16 %v389
        %v589 = vunpack.c.l.b16 %v390
        %v590 = vunpack.c.l.b16 %v391
        %v591 = vunpack.c.l.b16 %v392
        %v592 = vunpack.c.l.b16 %v393
        %v593 = vunpack.c.l.b16 %v394
        %v594 = vunpack.c.l.b16 %v395
        %v595 = vunpack.c.l.b16 %v396
        %v596 = vunpack.c.l.b16 %v397
        %v597 = vunpack.c.l.b16 %v398
        %v598 = vunpack.c.l.b16 %v399
        %v599 = vunpack.c.l.b16 %v400
        %v600 = vunpack.c.l.b16 %v401
        %v601 = vunpack.c.l.b16 %v402
        %v602 = vunpack.c.l.b16 %v403
        %v603 = vunpack.c.l.b16 %v404
        %v604 = vunpack.c.l.b16 %v405
        %v605 = vunpack.c.l.b16 %v406
        %v606 = vunpack.c.l.b16 %v407
        %v607 = vunpack.c.l.b16 %v408
        %v608 = vunpack.c.l.b16 %v409
        %v609 = vunpack.c.l.b16 %v410
        %v610 = vunpack.c.l.b16 %v411
        %v611 = vunpack.c.l.b16 %v412
        %v612 = vunpack.c.l.b16 %v413
        %v613 = vunpack.c.l.b16 %v414
        %v614 = vunpack.c.l.b16 %v415
        %v615 = vunpack.c.l.b16 %v416
        %v616 = vunpack.c.l.b16 %v417
        %v617 = vunpack.c.l.b16 %v418
        %v618 = vunpack.c.l.b16 %v419
        %v619 = vunpack.c.l.b16 %v420
        %v620 = vunpack.c.l.b16 %v421
        %v621 = vunpack.c.l.b16 %v422
        %v622 = vunpack.c.l.b16 %v423
        %v623 = vunpack.c.l.b16 %v424
        %v624 = vunpack.c.l.b16 %v425
        %v625 = vunpack.c.l.b16 %v426
        %v626 = vunpack.c.l.b16 %v427
        %v627 = vunpack.c.l.b16 %v428
        %v628 = vunpack.c.l.b16 %v429
        %v629 = vunpack.c.l.b16 %v430
        %v630 = vunpack.c.l.b16 %v431
        %v631 = vunpack.c.l.b16 %v432
        %v632 = vunpack.c.l.b16 %v433
        %v633 = vunpack.c.l.b16 %v434
        %v634 = vunpack.c.l.b16 %v435
        %v635 = vunpack.c.l.b16 %v436
        %v636 = vunpack.c.l.b16 %v437
        %v637 = vunpack.c.l.b16 %v438
        %v638 = vunpack.c.l.b16 %v439
        %v639 = vunpack.c.l.b16 %v440
        %v640 = vunpack.c.l.b16 %v441
        %v641 = vpack.c.b16 %v546, %v545
        %v642 = vpack.c.b16 %v548, %v547
        %v643 = vpack.c.b16 %v550, %v549
        %v644 = vpack.c.b16 %v552, %v551
        %v645 = vpack.c.b16 %v554, %v553
        %v646 = vpack.c.b16 %v556, %v555
        %v647 = vpack.c.b16 %v558, %v557
        %v648 = vpack.c.b16 %v560, %v559
        %v649 = vpack.c.b16 %v562, %v561
        %v650 = vpack.c.b16 %v564, %v563
        %v651 = vpack.c.b16 %v566, %v565
        %v652 = vpack.c.b16 %v568, %v567
        %v653 = vpack.c.b16 %v570, %v569
        %v654 = vpack.c.b16 %v572, %v571
        %v655 = vpack.c.b16 %v574, %v573
        %v656 = vpack.c.b16 %v576, %v575
        %v657 = vpack.c.b16 %v578, %v577
        %v658 = vpack.c.b16 %v580, %v579
        %v659 = vpack.c.b16 %v582, %v581
        %v660 = vpack.c.b16 %v584, %v583
        %v661 = vpack.c.b16 %v586, %v585
        %v662 = vpack.c.b16 %v588, %v587
        %v663 = vpack.c.b16 %v590, %v589
        %v664 = vpack.c.b16 %v592, %v591
        %v665 = vpack.c.b16 %v594, %v593
        %v666 = vpack.c.b16 %v596, %v595
        %v667 = vpack.c.b16 %v598, %v597
        %v668 = vpack.c.b16 %v600, %v599
        %v669 = vpack.c.b16 %v602, %v601
        %v670 = vpack.c.b16 %v604, %v603
        %v671 = vpack.c.b16 %v606, %v605
        %v672 = vpack.c.b16 %v608, %v607
        %v673 = vpack.c.b16 %v610, %v609
        %v674 = vpack.c.b16 %v612, %v611
        %v675 = vpack.c.b16 %v614, %v613
        %v676 = vpack.c.b16 %v616, %v615
        %v677 = vpack.c.b16 %v618, %v617
        %v678 = vpack.c.b16 %v620, %v619
        %v679 = vpack.c.b16 %v622, %v621
        %v680 = vpack.c.b16 %v624, %v623
        %v681 = vpack.c.b16 %v626, %v625
        %v682 = vpack.c.b16 %v628, %v627
        %v683 = vpack.c.b16 %v630, %v629
        %v684 = vpack.c.b16 %v632, %v631
        %v685 = vpack.c.b16 %v634, %v633
        %v686 = vpack.c.b16 %v636, %v635
        %v687 = vpack.c.b16 %v638, %v637
        %v688 = vpack.c.b16 %v640, %v639
        %737 = vmatprep.subr.bf16.mxu0 0
        %738 = vmatpush1.bf16.msra.mxu0 %v641
        %739 = vmatprep.subr.bf16.mxu0 0
        %740 = vmatpush1.bf16.msra.mxu0 %v642
        %741 = vmatprep.subr.bf16.mxu0 0
        %742 = vmatpush1.bf16.msra.mxu0 %v643
        %743 = vmatprep.subr.bf16.mxu0 0
        %744 = vmatpush1.bf16.msra.mxu0 %v644
        %745 = vmatprep.subr.bf16.mxu0 0
        %746 = vmatpush1.bf16.msra.mxu0 %v645
        %747 = vmatprep.subr.bf16.mxu0 0
        %748 = vmatpush1.bf16.msra.mxu0 %v646
        %749 = vmatprep.subr.bf16.mxu0 0
        %750 = vmatpush1.bf16.msra.mxu0 %v647
        %751 = vmatprep.subr.bf16.mxu0 0
        %752 = vmatpush1.bf16.msra.mxu0 %v648
        %753 = vmatprep.subr.bf16.mxu0 0
        %754 = vmatpush1.bf16.msra.mxu0 %v649
        %755 = vmatprep.subr.bf16.mxu0 0
        %756 = vmatpush1.bf16.msra.mxu0 %v650
        %757 = vmatprep.subr.bf16.mxu0 0
        %758 = vmatpush1.bf16.msra.mxu0 %v651
        %759 = vmatprep.subr.bf16.mxu0 0
        %760 = vmatpush1.bf16.msra.mxu0 %v652
        %761 = vmatprep.subr.bf16.mxu0 0
        %762 = vmatpush1.bf16.msra.mxu0 %v653
        %763 = vmatprep.subr.bf16.mxu0 0
        %764 = vmatpush1.bf16.msra.mxu0 %v654
        %765 = vmatprep.subr.bf16.mxu0 0
        %766 = vmatpush1.bf16.msra.mxu0 %v655
        %767 = vmatprep.subr.bf16.mxu0 0
        %768 = vmatpush1.bf16.msra.mxu0 %v656
        %769 = vmatprep.mubr.bf16.mxu0 %v341
        %770 = vmatmul.mubr.bf16.gmra.mrb[0].mxu0 %v340
        %v771 = vpop.f32.mrb[0].mxu0
        %v772 = vadd.f32 %v447, %v771
        %v773 = vpop.f32.mrb[0].mxu0
        %v774 = vpop.f32.mrb[0].mxu0
        %v775 = vadd.f32 %v447, %v774
        %v776 = vpop.f32.mrb[0].mxu0
        %777 = vdwg.mxu0
        %778 = vmatprep.subr.bf16.mxu0 0
        %779 = vmatpush1.bf16.msra.mxu0 %v657
        %780 = vmatprep.subr.bf16.mxu0 0
        %781 = vmatpush1.bf16.msra.mxu0 %v658
        %782 = vmatprep.subr.bf16.mxu0 0
        %783 = vmatpush1.bf16.msra.mxu0 %v659
        %784 = vmatprep.subr.bf16.mxu0 0
        %785 = vmatpush1.bf16.msra.mxu0 %v660
        %786 = vmatprep.subr.bf16.mxu0 0
        %787 = vmatpush1.bf16.msra.mxu0 %v661
        %788 = vmatprep.subr.bf16.mxu0 0
        %789 = vmatpush1.bf16.msra.mxu0 %v662
        %790 = vmatprep.subr.bf16.mxu0 0
        %791 = vmatpush1.bf16.msra.mxu0 %v663
        %792 = vmatprep.subr.bf16.mxu0 0
        %793 = vmatpush1.bf16.msra.mxu0 %v664
        %794 = vmatprep.subr.bf16.mxu0 0
        %795 = vmatpush1.bf16.msra.mxu0 %v665
        %796 = vmatprep.subr.bf16.mxu0 0
        %797 = vmatpush1.bf16.msra.mxu0 %v666
        %798 = vmatprep.subr.bf16.mxu0 0
        %799 = vmatpush1.bf16.msra.mxu0 %v667
        %800 = vmatprep.subr.bf16.mxu0 0
        %801 = vmatpush1.bf16.msra.mxu0 %v668
        %802 = vmatprep.subr.bf16.mxu0 0
        %803 = vmatpush1.bf16.msra.mxu0 %v669
        %804 = vmatprep.subr.bf16.mxu0 0
        %805 = vmatpush1.bf16.msra.mxu0 %v670
        %806 = vmatprep.subr.bf16.mxu0 0
        %807 = vmatpush1.bf16.msra.mxu0 %v671
        %808 = vmatprep.subr.bf16.mxu0 0
        %809 = vmatpush1.bf16.msra.mxu0 %v672
        %810 = vmatprep.mubr.bf16.mxu0 %v343
        %811 = vmatmul.mubr.bf16.gmra.mrb[0].mxu0 %v342
        %v812 = vpop.f32.mrb[0].mxu0
        %v813 = vadd.f32 %v772, %v812
        %v814 = vpop.f32.mrb[0].mxu0
        %v815 = vpop.f32.mrb[0].mxu0
        %v816 = vadd.f32 %v775, %v815
        %v817 = vpop.f32.mrb[0].mxu0
        %818 = vdwg.mxu0
        %819 = vmatprep.subr.bf16.mxu0 0
        %820 = vmatpush1.bf16.msra.mxu0 %v673
        %821 = vmatprep.subr.bf16.mxu0 0
        %822 = vmatpush1.bf16.msra.mxu0 %v674
        %823 = vmatprep.subr.bf16.mxu0 0
        %824 = vmatpush1.bf16.msra.mxu0 %v675
        %825 = vmatprep.subr.bf16.mxu0 0
        %826 = vmatpush1.bf16.msra.mxu0 %v676
        %827 = vmatprep.subr.bf16.mxu0 0
        %828 = vmatpush1.bf16.msra.mxu0 %v677
        %829 = vmatprep.subr.bf16.mxu0 0
        %830 = vmatpush1.bf16.msra.mxu0 %v678
        %831 = vmatprep.subr.bf16.mxu0 0
        %832 = vmatpush1.bf16.msra.mxu0 %v679
        %833 = vmatprep.subr.bf16.mxu0 0
        %834 = vmatpush1.bf16.msra.mxu0 %v680
        %835 = vmatprep.subr.bf16.mxu0 0
        %836 = vmatpush1.bf16.msra.mxu0 %v681
        %837 = vmatprep.subr.bf16.mxu0 0
        %838 = vmatpush1.bf16.msra.mxu0 %v682
        %839 = vmatprep.subr.bf16.mxu0 0
        %840 = vmatpush1.bf16.msra.mxu0 %v683
        %841 = vmatprep.subr.bf16.mxu0 0
        %842 = vmatpush1.bf16.msra.mxu0 %v684
        %843 = vmatprep.subr.bf16.mxu0 0
        %844 = vmatpush1.bf16.msra.mxu0 %v685
        %845 = vmatprep.subr.bf16.mxu0 0
        %846 = vmatpush1.bf16.msra.mxu0 %v686
        %847 = vmatprep.subr.bf16.mxu0 0
        %848 = vmatpush1.bf16.msra.mxu0 %v687
        %849 = vmatprep.subr.bf16.mxu0 0
        %850 = vmatpush1.bf16.msra.mxu0 %v688
        %851 = vmatprep.mubr.bf16.mxu0 %v345
        %852 = vmatmul.mubr.bf16.gmra.mrb[0].mxu0 %v344
        %v853 = vpop.f32.mrb[0].mxu0
        %v854 = vadd.f32 %v813, %v853
        %v855 = vpop.f32.mrb[0].mxu0
        %v856 = vpop.f32.mrb[0].mxu0
        %v857 = vadd.f32 %v816, %v856
        %v858 = vpop.f32.mrb[0].mxu0
        %859 = vdwg.mxu0
        %v860 = vmul.f32 %v854, 0.01
        %v861 = vmul.f32 %v857, 0.01
        %v862 = vmax.f32 %v854, %v860
        %v863 = vmax.f32 %v857, %v861
        %v864 = vpack.c.bf16 %v863, %v862
        %v865 = vld [vmem:[%s3] sm:$0xf]
        %v866 = vld [vmem:[%s3 + $0x4] sm:$0xf]
        %v867 = vld [vmem:[%s3 + $0x8] sm:$0xf]
        %v868 = vld [vmem:[%s3 + $0xc] sm:$0xf]
        %v869 = vld [vmem:[%s3 + $0x10] sm:$0xf]
        %v870 = vld [vmem:[%s3 + $0x14] sm:$0xf]
        %v871 = vld [vmem:[%s3 + $0x18] sm:$0xf]
        %v872 = vld [vmem:[%s3 + $0x1c] sm:$0xf]
        %v873 = vld [vmem:[%s3 + $0x20] sm:$0xf]
        %v874 = vld [vmem:[%s3 + $0x24] sm:$0xf]
        %v875 = vld [vmem:[%s3 + $0x28] sm:$0xf]
        %v876 = vld [vmem:[%s3 + $0x2c] sm:$0xf]
        %v877 = vld [vmem:[%s3 + $0x30] sm:$0xf]
        %v878 = vld [vmem:[%s3 + $0x34] sm:$0xf]
        %v879 = vld [vmem:[%s3 + $0x38] sm:$0xf]
        %v880 = vld [vmem:[%s3 + $0x3c] sm:$0xf]
        %v881 = vld [vmem:[%s4] sm:$0x1]
        %v883 = vlaneseq
        %v884 = vshrl.u32 %v883, 7
        %v885 = vsub.s32 0, %v884
        %v886 = vrot.slane %v881, %v885
        %v904 = vunpack.c.l.b16 %v865
        %v905 = vunpack.c.l.b16 %v866
        %v906 = vunpack.c.l.b16 %v867
        %v907 = vunpack.c.l.b16 %v868
        %v908 = vunpack.c.l.b16 %v869
        %v909 = vunpack.c.l.b16 %v870
        %v910 = vunpack.c.l.b16 %v871
        %v911 = vunpack.c.l.b16 %v872
        %v912 = vunpack.c.l.b16 %v873
        %v913 = vunpack.c.l.b16 %v874
        %v914 = vunpack.c.l.b16 %v875
        %v915 = vunpack.c.l.b16 %v876
        %v916 = vunpack.c.l.b16 %v877
        %v917 = vunpack.c.l.b16 %v878
        %v918 = vunpack.c.l.b16 %v879
        %v919 = vunpack.c.l.b16 %v880
        %v920 = vpack.c.b16 %v905, %v904
        %v921 = vpack.c.b16 %v907, %v906
        %v922 = vpack.c.b16 %v909, %v908
        %v923 = vpack.c.b16 %v911, %v910
        %v924 = vpack.c.b16 %v913, %v912
        %v925 = vpack.c.b16 %v915, %v914
        %v926 = vpack.c.b16 %v917, %v916
        %v927 = vpack.c.b16 %v919, %v918
        %936 = vmatprep.subr.bf16.mxu0 0
        %937 = vmatpush1.bf16.msra.mxu0 %v920
        %938 = vmatprep.subr.bf16.mxu0 0
        %939 = vmatpush1.bf16.msra.mxu0 %v921
        %940 = vmatprep.subr.bf16.mxu0 0
        %941 = vmatpush1.bf16.msra.mxu0 %v922
        %942 = vmatprep.subr.bf16.mxu0 0
        %943 = vmatpush1.bf16.msra.mxu0 %v923
        %944 = vmatprep.subr.bf16.mxu0 0
        %945 = vmatpush1.bf16.msra.mxu0 %v924
        %946 = vmatprep.subr.bf16.mxu0 0
        %947 = vmatpush1.bf16.msra.mxu0 %v925
        %948 = vmatprep.subr.bf16.mxu0 0
        %949 = vmatpush1.bf16.msra.mxu0 %v926
        %950 = vmatprep.subr.bf16.mxu0 0
        %951 = vmatpush1.bf16.msra.mxu0 %v927
        %952 = vmatprep.subr.bf16.mxu0 0
        %953 = vmatpush1.bf16.msra.mxu0 0
        %954 = vmatprep.subr.bf16.mxu0 0
        %955 = vmatpush1.bf16.msra.mxu0 0
        %956 = vmatprep.subr.bf16.mxu0 0
        %957 = vmatpush1.bf16.msra.mxu0 0
        %958 = vmatprep.subr.bf16.mxu0 0
        %959 = vmatpush1.bf16.msra.mxu0 0
        %960 = vmatprep.subr.bf16.mxu0 0
        %961 = vmatpush1.bf16.msra.mxu0 0
        %962 = vmatprep.subr.bf16.mxu0 0
        %963 = vmatpush1.bf16.msra.mxu0 0
        %964 = vmatprep.subr.bf16.mxu0 0
        %965 = vmatpush1.bf16.msra.mxu0 0
        %966 = vmatprep.subr.bf16.mxu0 0
        %967 = vmatpush1.bf16.msra.mxu0 0
        %968 = vmatprep.mubr.bf16.mxu0 0
        %969 = vmatmul.mubr.bf16.gmra.mrb[0].mxu0 %v864
        %v970 = vpop.f32.mrb[0].mxu0
        %v971 = vadd.f32 %v886, %v970
        %v972 = vpop.f32.mrb[0].mxu0
        %v973 = vpop.f32.mrb[0].mxu0
        %v974 = vadd.f32 %v886, %v973
        %v975 = vpop.f32.mrb[0].mxu0
        %976 = vdwg.mxu0
        %v977 = vmul.f32 %v971, 0.01
        %v978 = vmul.f32 %v974, 0.01
        %v979 = vmax.f32 %v971, %v977
        %v980 = vmax.f32 %v974, %v978
        %v981 = vld [vmem:[%s5] sm:$0xff]
        %v982 = vld [vmem:[%s5 + $0x8] sm:$0xff]
        %v983 = vld [vmem:[%s5 + $0x10] sm:$0xff]
        %v984 = vld [vmem:[%s5 + $0x18] sm:$0xff]
        %v985 = vld [vmem:[%s5 + $0x20] sm:$0xff]
        %v986 = vld [vmem:[%s5 + $0x28] sm:$0xff]
        %v987 = vld [vmem:[%s5 + $0x30] sm:$0xff]
        %v988 = vld [vmem:[%s5 + $0x38] sm:$0xff]
        %v989 = vld [vmem:[%s5 + $0x40] sm:$0xff]
        %v990 = vld [vmem:[%s5 + $0x48] sm:$0xff]
        %v991 = vld [vmem:[%s5 + $0x50] sm:$0xff]
        %v992 = vld [vmem:[%s5 + $0x58] sm:$0xff]
        %v993 = vld [vmem:[%s5 + $0x60] sm:$0xff]
        %v994 = vld [vmem:[%s5 + $0x68] sm:$0xff]
        %v995 = vld [vmem:[%s5 + $0x70] sm:$0xff]
        %v996 = vld [vmem:[%s5 + $0x78] sm:$0xff]
        %v997 = vld [vmem:[%s6] sm:$0x1]
        %v999 = vlaneseq
        %v1000 = vshrl.u32 %v999, 7
        %v1001 = vsub.s32 0, %v1000
        %v1002 = vrot.slane %v997, %v1001
        %1004 = vmatprep.subr.mxu0 0.0
        %1005 = vmatpush1.msra.mxu0 %v981
        %1006 = vmatprep.subr.mxu0 0.0
        %1007 = vmatpush1.msra.mxu0 %v982
        %1008 = vmatprep.subr.mxu0 0.0
        %1009 = vmatpush1.msra.mxu0 %v983
        %1010 = vmatprep.subr.mxu0 0.0
        %1011 = vmatpush1.msra.mxu0 %v984
        %1012 = vmatprep.subr.mxu0 0.0
        %1013 = vmatpush1.msra.mxu0 %v985
        %1014 = vmatprep.subr.mxu0 0.0
        %1015 = vmatpush1.msra.mxu0 %v986
        %1016 = vmatprep.subr.mxu0 0.0
        %1017 = vmatpush1.msra.mxu0 %v987
        %1018 = vmatprep.subr.mxu0 0.0
        %1019 = vmatpush1.msra.mxu0 %v988
        %1020 = vmatprep.subr.mxu0 0.0
        %1021 = vmatpush1.msra.mxu0 %v989
        %1022 = vmatprep.subr.mxu0 0.0
        %1023 = vmatpush1.msra.mxu0 %v990
        %1024 = vmatprep.subr.mxu0 0.0
        %1025 = vmatpush1.msra.mxu0 %v991
        %1026 = vmatprep.subr.mxu0 0.0
        %1027 = vmatpush1.msra.mxu0 %v992
        %1028 = vmatprep.subr.mxu0 0.0
        %1029 = vmatpush1.msra.mxu0 %v993
        %1030 = vmatprep.subr.mxu0 0.0
        %1031 = vmatpush1.msra.mxu0 %v994
        %1032 = vmatprep.subr.mxu0 0.0
        %1033 = vmatpush1.msra.mxu0 %v995
        %1034 = vmatprep.subr.mxu0 0.0
        %1035 = vmatpush1.msra.mxu0 %v996
        %1036 = vmatprep.subr.mxu0 0.0
        %1037 = vmatpush1.msra.mxu0 0.0
        %1038 = vmatprep.subr.mxu0 0.0
        %1039 = vmatpush1.msra.mxu0 0.0
        %1040 = vmatprep.subr.mxu0 0.0
        %1041 = vmatpush1.msra.mxu0 0.0
        %1042 = vmatprep.subr.mxu0 0.0
        %1043 = vmatpush1.msra.mxu0 0.0
        %1044 = vmatprep.subr.mxu0 0.0
        %1045 = vmatpush1.msra.mxu0 0.0
        %1046 = vmatprep.subr.mxu0 0.0
        %1047 = vmatpush1.msra.mxu0 0.0
        %1048 = vmatprep.subr.mxu0 0.0
        %1049 = vmatpush1.msra.mxu0 0.0
        %1050 = vmatprep.subr.mxu0 0.0
        %1051 = vmatpush1.msra.mxu0 0.0
        %1052 = vmatprep.subr.mxu0 0.0
        %1053 = vmatpush1.msra.mxu0 0.0
        %1054 = vmatprep.subr.mxu0 0.0
        %1055 = vmatpush1.msra.mxu0 0.0
        %1056 = vmatprep.subr.mxu0 0.0
        %1057 = vmatpush1.msra.mxu0 0.0
        %1058 = vmatprep.subr.mxu0 0.0
        %1059 = vmatpush1.msra.mxu0 0.0
        %1060 = vmatprep.subr.mxu0 0.0
        %1061 = vmatpush1.msra.mxu0 0.0
        %1062 = vmatprep.subr.mxu0 0.0
        %1063 = vmatpush1.msra.mxu0 0.0
        %1064 = vmatprep.subr.mxu0 0.0
        %1065 = vmatpush1.msra.mxu0 0.0
        %1066 = vmatprep.subr.mxu0 0.0
        %1067 = vmatpush1.msra.mxu0 0.0
        %1068 = vmatprep.mubr.f32.mxu0 0.0
        %1069 = vmatmul.mubr.f32.gmra.mrb[0].mxu0 %v979
        %v1070 = vpop.f32.mrb[0].mxu0
        %v1071 = vadd.f32 %v1002, %v1070
        %v1072 = vpop.f32.mrb[0].mxu0
        %1073 = vmatprep.mubr.f32.mxu0 0.0
        %1074 = vmatmul.mubr.f32.gmra.mrb[0].mxu0 %v980
        %v1075 = vpop.f32.mrb[0].mxu0
        %v1076 = vadd.f32 %v1002, %v1075
        %v1077 = vpop.f32.mrb[0].mxu0
        %1078 = vdwg.mxu0
        %vm1079 = vcmask 48128
        %1080 = vst.msk [vmem:[%s315] sm:$0xff] %vm1079, %v1071
        %1081 = vst.msk [vmem:[%s315 + $0x8] sm:$0xff] %vm1079, %v1076
        %s1082 = sand.u32 %s182, 1
        %s1083 = sand.u32 %s182, 1
        %s1084 = smul.addr %s1083, 16
        %s1085 = scalar_lea.vmem [#allocation6], %s1084
        // Predicated region
        $region57: #{tpu_custom_call.1} parent=47 // pred_check
          %p1086 = pneg %p192
        $region58: #{tpu_custom_call.1} parent=47 // pred_check_branch
          %1088 = sbr.rel (%p1086) target = $region60
        $region59: #{tpu_custom_call.1} parent=47 // pred_region
          %s1089 = smul.u32 2, %s22
          %s1090 = ssub.s32 3, %s1089
          %p1091 = scmp.lt.s32.totalorder %s1090, 2
          %s1092 = scalar_select %p1091, %s1090, 2
          %s1093 = smul.u32 128, %s1092
          %p1094 = scmp.ne.s32.totalorder 0, %s1093
          %s1095 = smul.addr %s1089, 8
          %s1096 = scalar_lea.vmem %s7, %s1095
          // Predicated region
          $region61: #{tpu_custom_call.1} parent=59 // pred_check
            %p1097 = pneg %p1094
          $region62: #{tpu_custom_call.1} parent=59 // pred_check_branch
            %1099 = sbr.rel (%p1097) target = $region64
          $region63: #{tpu_custom_call.1} parent=59 // pred_region
            // Predicated region
            $region65: #{tpu_custom_call.1} parent=63 // pred_check
              _
            $region66: #{tpu_custom_call.1} parent=63 // pred_check_branch
              %1101 = sbr.rel (0) target = $region68
            $region67: #{tpu_custom_call.1} parent=63 // pred_region
              // Predicated region
              $region87: #{tpu_custom_call.1} parent=67 // pred_check
                _
              $region88: #{tpu_custom_call.1} parent=67 // pred_check_branch
                %1152 = sbr.rel (0) target = $region90
              $region89: #{tpu_custom_call.1} parent=67 // pred_region
                %s1153 = sshrl.u32 %s1092, 1
                // While loop
                $region91: #{tpu_custom_call.1} parent=89 // loop_pre_header
                  _
                $region92: #{tpu_custom_call.1} parent=89 // loop_header
                  %s1155 = sphi 0, %s1157
                  %p1156 = scmp.ge.s32.totalorder %s1155, %s1153
                  %s1160 = sphi 0, %s1169
                  %s1161 = sphi %s1085, %s1172
                  %s1162 = sphi %s1096, %s1173
                $region93: #{tpu_custom_call.1} parent=89 // loop_header_branch
                  %1159 = sbr.rel (%p1156) target = $region97
                $region94: #{tpu_custom_call.1} parent=89 // loop_body
                  %v1163 = vld [vmem:[%s1161] sm:$0xff]
                  %1164 = vst [vmem:[%s1162] sm:$0xff] %v1163
                  %v1165 = vld [vmem:[%s1161 + $0x8] sm:$0xff]
                  %1166 = vst [vmem:[%s1162 + $0x8] sm:$0xff] %v1165
                  %s1167 = sadd.s32 1, %s1160
                  %p1168 = scmp.ge.s32.totalorder %s1167, %s1153
                  %s1169 = scalar_select %p1168, 0, %s1167
                  %s1170 = smul.u32 %s1169, 16
                  %s1171 = smul.u32 %s1169, 16
                  %s1172 = scalar_lea.vmem %s1085, %s1170 [#allocation6]
                  %s1173 = scalar_lea.vmem %s1096, %s1171
                $region95: #{tpu_custom_call.1} parent=89 // loop_footer
                  %s1157 = sadd.s32 %s1155, 1
                $region96: #{tpu_custom_call.1} parent=89 // loop_footer_branch
                  %1154 = sbr.rel target = $region92
                $region97: #{tpu_custom_call.1} parent=89 // loop_exit
                  _
                %s1174 = sshrl.u32 %s1092, 1
                %s1175 = sand.u32 %s1092, 1
                %s1176 = smul.u32 %s1174, 2
                %s1177 = smul.u32 8, %s1176
                %s1178 = scalar_lea.vmem %s1085, %s1177 [#allocation6]
                %s1179 = smul.u32 8, %s1176
                %s1180 = scalar_lea.vmem %s1096, %s1179
                // While loop
                $region98: #{tpu_custom_call.1} parent=89 // loop_pre_header
                  _
                $region99: #{tpu_custom_call.1} parent=89 // loop_header
                  %s1182 = sphi 0, %s1184
                  %p1183 = scmp.ge.s32.totalorder %s1182, %s1175
                  %s1187 = sphi 0, %s1194
                  %s1188 = sphi %s1178, %s1197
                  %s1189 = sphi %s1180, %s1198
                $region100: #{tpu_custom_call.1} parent=89 // loop_header_branch
                  %1186 = sbr.rel (%p1183) target = $region104
                $region101: #{tpu_custom_call.1} parent=89 // loop_body
                  %v1190 = vld [vmem:[%s1188] sm:$0xff]
                  %1191 = vst [vmem:[%s1189] sm:$0xff] %v1190
                  %s1192 = sadd.s32 1, %s1187
                  %p1193 = scmp.ge.s32.totalorder %s1192, %s1175
                  %s1194 = scalar_select %p1193, 0, %s1192
                  %s1195 = smul.u32 %s1194, 8
                  %s1196 = smul.u32 %s1194, 8
                  %s1197 = scalar_lea.vmem %s1178, %s1195 [#allocation6]
                  %s1198 = scalar_lea.vmem %s1180, %s1196
                $region102: #{tpu_custom_call.1} parent=89 // loop_footer
                  %s1184 = sadd.s32 %s1182, 1
                $region103: #{tpu_custom_call.1} parent=89 // loop_footer_branch
                  %1181 = sbr.rel target = $region99
                $region104: #{tpu_custom_call.1} parent=89 // loop_exit
                  _
              $region90: #{tpu_custom_call.1} parent=67 // pred_fallthru
                _
              // Predicated region
              $region105: #{tpu_custom_call.1} parent=67 // pred_check
                _
              $region106: #{tpu_custom_call.1} parent=67 // pred_check_branch
                %1200 = sbr.rel target = $region108
              $region107: #{tpu_custom_call.1} parent=67 // pred_region
                _
              $region108: #{tpu_custom_call.1} parent=67 // pred_fallthru
                _
            $region68: #{tpu_custom_call.1} parent=63 // pred_fallthru
              _
            // Predicated region
            $region69: #{tpu_custom_call.1} parent=63 // pred_check
              _
            $region70: #{tpu_custom_call.1} parent=63 // pred_check_branch
              %1103 = sbr.rel target = $region72
            $region71: #{tpu_custom_call.1} parent=63 // pred_region
              %s1105 = sshrl.u32 %s1092, 1
              // While loop
              $region73: #{tpu_custom_call.1} parent=71 // loop_pre_header
                _
              $region74: #{tpu_custom_call.1} parent=71 // loop_header
                %s1107 = sphi 0, %s1109
                %p1108 = scmp.ge.s32.totalorder %s1107, %s1105
                %s1112 = sphi 0, %s1121
                %s1113 = sphi %s1085, %s1124
                %s1114 = sphi %s1096, %s1125
              $region75: #{tpu_custom_call.1} parent=71 // loop_header_branch
                %1111 = sbr.rel (%p1108) target = $region79
              $region76: #{tpu_custom_call.1} parent=71 // loop_body
                %v1115 = vld [vmem:[%s1113] sm:$0xff]
                %1116 = vst [vmem:[%s1114] sm:$0xff] %v1115
                %v1117 = vld [vmem:[%s1113 + $0x8] sm:$0xff]
                %1118 = vst [vmem:[%s1114 + $0x8] sm:$0xff] %v1117
                %s1119 = sadd.s32 1, %s1112
                %p1120 = scmp.ge.s32.totalorder %s1119, %s1105
                %s1121 = scalar_select %p1120, 0, %s1119
                %s1122 = smul.u32 %s1121, 16
                %s1123 = smul.u32 %s1121, 16
                %s1124 = scalar_lea.vmem %s1085, %s1122 [#allocation6]
                %s1125 = scalar_lea.vmem %s1096, %s1123
              $region77: #{tpu_custom_call.1} parent=71 // loop_footer
                %s1109 = sadd.s32 %s1107, 1
              $region78: #{tpu_custom_call.1} parent=71 // loop_footer_branch
                %1106 = sbr.rel target = $region74
              $region79: #{tpu_custom_call.1} parent=71 // loop_exit
                _
              %s1126 = sshrl.u32 %s1092, 1
              %s1127 = sand.u32 %s1092, 1
              %s1128 = smul.u32 %s1126, 2
              %s1129 = smul.u32 8, %s1128
              %s1130 = scalar_lea.vmem %s1085, %s1129 [#allocation6]
              %s1131 = smul.u32 8, %s1128
              %s1132 = scalar_lea.vmem %s1096, %s1131
              // While loop
              $region80: #{tpu_custom_call.1} parent=71 // loop_pre_header
                _
              $region81: #{tpu_custom_call.1} parent=71 // loop_header
                %s1134 = sphi 0, %s1136
                %p1135 = scmp.ge.s32.totalorder %s1134, %s1127
                %s1139 = sphi 0, %s1146
                %s1140 = sphi %s1130, %s1149
                %s1141 = sphi %s1132, %s1150
              $region82: #{tpu_custom_call.1} parent=71 // loop_header_branch
                %1138 = sbr.rel (%p1135) target = $region86
              $region83: #{tpu_custom_call.1} parent=71 // loop_body
                %v1142 = vld [vmem:[%s1140] sm:$0xff]
                %1143 = vst [vmem:[%s1141] sm:$0xff] %v1142
                %s1144 = sadd.s32 1, %s1139
                %p1145 = scmp.ge.s32.totalorder %s1144, %s1127
                %s1146 = scalar_select %p1145, 0, %s1144
                %s1147 = smul.u32 %s1146, 8
                %s1148 = smul.u32 %s1146, 8
                %s1149 = scalar_lea.vmem %s1130, %s1147 [#allocation6]
                %s1150 = scalar_lea.vmem %s1132, %s1148
              $region84: #{tpu_custom_call.1} parent=71 // loop_footer
                %s1136 = sadd.s32 %s1134, 1
              $region85: #{tpu_custom_call.1} parent=71 // loop_footer_branch
                %1133 = sbr.rel target = $region81
              $region86: #{tpu_custom_call.1} parent=71 // loop_exit
                _
            $region72: #{tpu_custom_call.1} parent=63 // pred_fallthru
              _
          $region64: #{tpu_custom_call.1} parent=59 // pred_fallthru
            _
          %1201 = vnop
        $region60: #{tpu_custom_call.1} parent=47 // pred_fallthru
          _
      $region48: #{tpu_custom_call.1} parent=5 // pred_fallthru
        _
      %p1202 = scmp.le.s32.totalorder 2, %s17
      // Predicated region
      $region109: #{tpu_custom_call.1} parent=5 // pred_check
        %p1203 = pneg %p1202
      $region110: #{tpu_custom_call.1} parent=5 // pred_check_branch
        %1205 = sbr.rel (%p1203) target = $region112
      $region111: #{tpu_custom_call.1} parent=5 // pred_region
        %s1206 = ssub.s32 %s17, 2
        // Predicated region
        $region113: #{tpu_custom_call.1} parent=111 // pred_check
          %p1207 = pneg %p198
        $region114: #{tpu_custom_call.1} parent=111 // pred_check_branch
          %1209 = sbr.rel (%p1207) target = $region116
        $region115: #{tpu_custom_call.1} parent=111 // pred_region
          %s1210 = sand.u32 %s183, 1
          %s1211 = sand.u32 %s183, 1
          %s1212 = smul.addr %s1211, 16
          %s1213 = scalar_lea.vmem [#allocation6], %s1212
        $region116: #{tpu_custom_call.1} parent=111 // pred_fallthru
          _
      $region112: #{tpu_custom_call.1} parent=5 // pred_fallthru
        _
    $region6: #{tpu_custom_call.1} parent=1 // loop_footer
      %s21 = sadd.s32 1, %s17
    $region7: #{tpu_custom_call.1} parent=1 // loop_footer_branch
      %16 = sbr.rel target = $region3
    $region8: #{tpu_custom_call.1} parent=1 // loop_exit
      _
    %1214 = vsyncpa [#allocation3], 1
    %s1215 = scalar_lea.sflag [#allocation3], 1
    %1216 = vsyncpa %s1215, 1
    %1217 = vsyncpa [#allocation5], 1

</llo_original>
